<compile_context>
chip_gen: v6e
topology: v6e:2x2x1
jax: 0.10.0
libtpu: 0.0.40
codegen_flags: <defaults>
</compile_context>

<pallas_src>
import functools
from typing import NamedTuple

import jax
import jax.numpy as jnp
from jax.experimental import pallas as pl
from jax.experimental.pallas import tpu as pltpu


def _round_up(v, m):
    return ((v + m - 1) // m) * m


class MlpMeta(NamedTuple):
    in_size: int
    out_size: int
    in_pad: int
    out_pad: int
    n_layers: int


# ----------------------------------------------------------------------------
# Fused Pallas kernel: h = x; for each layer: h = act(h @ W_l + b_l)
# ----------------------------------------------------------------------------
def _mlp_kernel(*refs, n_layers: int):
    # refs layout: x_ref, w0, b0, w1, b1, ..., w_{L-1}, b_{L-1}, o_ref
    x_ref = refs[0]
    o_ref = refs[-1]
    wb_refs = refs[1:-1]

    h = x_ref[...]                                   # bf16 activations
    for l in range(n_layers):
        w = wb_refs[2 * l][...]                      # bf16 [In_pad, Out_pad]
        b = wb_refs[2 * l + 1][...]                  # f32  [1, Out_pad]
        acc = jnp.dot(h, w, preferred_element_type=jnp.float32) + b
        if l < n_layers - 1:
            # hidden layers: ReLU on the f32 accumulator, back to bf16 for next dot
            h = jnp.maximum(acc, 0.0).astype(h.dtype)
        else:
            # last layer: identity output activation, single cast at the store
            o_ref[...] = acc.astype(o_ref.dtype)


# ----------------------------------------------------------------------------
# One-time parameter preparation (padding + dtype cast happen ONCE, not per call)
# ----------------------------------------------------------------------------
def prepare_mlp(params, compute_dtype=jnp.bfloat16):
    """params: list of (w [in, out], b [out]) float32. Returns (padded, meta)."""
    in_size = params[0][0].shape[0]
    out_size = params[-1][0].shape[1]
    in_pad = _round_up(in_size, 128)
    # TODO(synk): on v6e/v7x, widths in 129..255 would be slightly faster padded
    # to 256 (MXU tile is 2x256^2); we keep 128 alignment (optimal on v5e).
    padded = []
    prev_pad = in_pad
    for (w, b) in params:
        i, o = w.shape
        o_pad = _round_up(o, 128)
        wp = (jnp.zeros((prev_pad, o_pad), compute_dtype)
              .at[:i, :o].set(w.astype(compute_dtype)))
        bp = jnp.zeros((1, o_pad), jnp.float32).at[0, :o].set(b.astype(jnp.float32))
        padded.append((wp, bp))
        prev_pad = o_pad
    meta = MlpMeta(in_size, out_size, in_pad, prev_pad, len(params))
    return tuple(padded), meta


def _pick_tm(batch, max_tm=1024):
    """Batch (sublane) tile: minimize padding waste, prefer bigger tiles,
    guarantee >=2 tiles when possible so v7x's two TCs both get work."""
    b8 = _round_up(batch, 8)
    cands = [t for t in (128, 256, 512, 1024) if t <= min(b8, max_tm)]
    if b8 <= max_tm:
        cands.append(b8)
    tm = min(cands, key=lambda t: (_round_up(b8, t) - b8, -t))
    if _round_up(b8, tm) // tm == 1 and b8 >= 16:
        tm = _round_up(b8 // 2, 8)        # split so the "parallel" axis has 2 tiles
    return tm


# ----------------------------------------------------------------------------
# Jitted forward: pads only x per call, one pallas_call for the whole MLP
# ----------------------------------------------------------------------------
@functools.partial(jax.jit, static_argnames=("meta", "return_preactivations"))
def mlp_forward(padded_params, x, meta, return_preactivations=False):
    B = x.shape[0]
    cdtype = padded_params[0][0].dtype
    out_dtype = x.dtype

    tm = _pick_tm(B)
    b_pad = _round_up(_round_up(B, 8), tm)
    grid = (b_pad // tm,)

    # Only the activations get padded per call (params were padded once).
    x_pad = (jnp.zeros((b_pad, meta.in_pad), cdtype)
             .at[:B, :meta.in_size].set(x.astype(cdtype)))

    in_specs = [pl.BlockSpec((tm, meta.in_pad), lambda i: (i, 0))]
    inputs = [x_pad]
    for (wp, bp) in padded_params:
        # Grid-invariant blocks: pinned index_map + single-buffered -> exactly one
        # VMEM-resident copy reused across all batch tiles.
        in_specs.append(pl.BlockSpec(wp.shape, lambda i: (0, 0),
                                     pipeline_mode=pl.Buffered(1)))
        in_specs.append(pl.BlockSpec(bp.shape, lambda i: (0, 0),
                                     pipeline_mode=pl.Buffered(1)))
        inputs.append(wp)
        inputs.append(bp)
    out_specs = pl.BlockSpec((tm, meta.out_pad), lambda i: (i, 0))

    # Explicit VMEM budget: weights (x1, single-buffered) + double-buffered x/out
    # tiles + live f32 accumulator; capped at 64 MiB so it also fits v7x.
    weight_bytes = sum(wp.size * wp.dtype.itemsize + bp.size * bp.dtype.itemsize
                       for wp, bp in padded_params)
    widths = [meta.in_pad] + [wp.shape[1] for wp, _ in padded_params]
    io_bytes = (2 * tm * meta.in_pad * x_pad.dtype.itemsize
                + 2 * tm * meta.out_pad * x.dtype.itemsize)
    act_bytes = 2 * tm * max(widths) * 4
    vmem_limit = int(min(weight_bytes + io_bytes + act_bytes + (4 << 20), 64 << 20))

    kernel = functools.partial(_mlp_kernel, n_layers=meta.n_layers)
    out_padded = pl.pallas_call(
        kernel,
        out_shape=jax.ShapeDtypeStruct((b_pad, meta.out_pad), out_dtype),
        grid_spec=pl.GridSpec(grid=grid, in_specs=in_specs, out_specs=out_specs),
        compiler_params=pltpu.CompilerParams(
            dimension_semantics=("parallel",),   # megacore-shard batch tiles (v7x)
            vmem_limit_bytes=vmem_limit,
        ),
    )(*inputs)

    output = out_padded[:B, :meta.out_size]
    # output_activation is identity, so preactivation == output by construction.
    if return_preactivations:
        return output, output
    return output


# ----------------------------------------------------------------------------
# Parameter init mirroring the PyTorch module's __init__
# ----------------------------------------------------------------------------
def fanin_init(key, shape):
    # ptu.fanin_init: uniform(-1/sqrt(fan_in), 1/sqrt(fan_in)); fan_in = in_features
    fan_in = shape[0]
    bound = 1.0 / jnp.sqrt(fan_in)
    return jax.random.uniform(key, shape, jnp.float32, -bound, bound)


def init_mlp_params(key, input_size, hidden_sizes, output_size,
                    init_w=0.003, b_init_value=0.1):
    params = []
    in_size = input_size
    for next_size in hidden_sizes:
        key, wk = jax.random.split(key)
        w = fanin_init(wk, (in_size, next_size))          # [in, out] (== weight.T)
        b = jnp.full((next_size,), b_init_value, jnp.float32)
        params.append((w, b))
        in_size = next_size
    key, wk, bk = jax.random.split(key, 3)
    w_last = jax.random.uniform(wk, (in_size, output_size), jnp.float32,
                                -init_w, init_w)
    b_last = jax.random.uniform(bk, (output_size,), jnp.float32,
                                -init_w, init_w)
    params.append((w_last, b_last))
    return params


# ----------------------------------------------------------------------------
if __name__ == "__main__":
    key = jax.random.PRNGKey(0)

    batch = 2
    input_size = 16
    hidden_sizes = (32, 32)
    output_size = 8

    key, pkey, xkey = jax.random.split(key, 3)
    params = init_mlp_params(pkey, input_size, hidden_sizes, output_size)
    x = jax.random.normal(xkey, (batch, input_size), jnp.float32)

    padded_params, meta = prepare_mlp(params)          # pad/cast once
    out = mlp_forward(padded_params, x, meta)          # jitted; only x padded here
    out = jax.block_until_ready(out)

    # Reference check in plain f32 JAX (same math as the PyTorch module).
    h_ref = x
    for (w, b) in params[:-1]:
        h_ref = jnp.maximum(h_ref @ w + b, 0.0)
    ref = h_ref @ params[-1][0] + params[-1][1]
    assert out.shape == (batch, output_size)
    # Looser tolerance: kernel uses bf16 MXU operands with f32 accumulation.
    assert jnp.allclose(out, ref, atol=2e-2, rtol=2e-2), float(jnp.max(jnp.abs(out - ref)))

    print("KERNEL_OK")
</pallas_src>

<mosaic_0001>
module attributes {stable_mosaic.version = 11 : i64} {
  func.func @_mlp_kernel(%arg0: i32, %arg1: memref<8x128xbf16, #tpu.memory_space<vmem>>, %arg2: memref<128x128xbf16, #tpu.memory_space<vmem>>, %arg3: memref<1x128xf32, #tpu.memory_space<vmem>>, %arg4: memref<128x128xbf16, #tpu.memory_space<vmem>>, %arg5: memref<1x128xf32, #tpu.memory_space<vmem>>, %arg6: memref<128x128xbf16, #tpu.memory_space<vmem>>, %arg7: memref<1x128xf32, #tpu.memory_space<vmem>>, %arg8: memref<8x128xf32, #tpu.memory_space<vmem>>) attributes {dimension_semantics = [#tpu.dimension_semantics<parallel>], iteration_bounds = array<i64: 1>, scalar_prefetch = 0 : i64, scratch_operands = 0 : i64, tpu.core_type = #tpu.core_type<tc>, window_params = [{transform_indices = @transform_0, window_bounds = array<i64: 8, 128>}, {pipeline_mode = #tpu.pipeline_mode<synchronous>, transform_indices = @transform_1, window_bounds = array<i64: 128, 128>}, {pipeline_mode = #tpu.pipeline_mode<synchronous>, transform_indices = @transform_2, window_bounds = array<i64: 1, 128>}, {pipeline_mode = #tpu.pipeline_mode<synchronous>, transform_indices = @transform_3, window_bounds = array<i64: 128, 128>}, {pipeline_mode = #tpu.pipeline_mode<synchronous>, transform_indices = @transform_4, window_bounds = array<i64: 1, 128>}, {pipeline_mode = #tpu.pipeline_mode<synchronous>, transform_indices = @transform_5, window_bounds = array<i64: 128, 128>}, {pipeline_mode = #tpu.pipeline_mode<synchronous>, transform_indices = @transform_6, window_bounds = array<i64: 1, 128>}, {transform_indices = @transform_7, window_bounds = array<i64: 8, 128>}]} {
    %c0 = arith.constant 0 : index
    %c0_0 = arith.constant 0 : index
    %0 = vector.load %arg1[%c0, %c0_0] : memref<8x128xbf16, #tpu.memory_space<vmem>>, vector<8x128xbf16>
    %c0_1 = arith.constant 0 : index
    %c0_2 = arith.constant 0 : index
    %1 = vector.load %arg2[%c0_1, %c0_2] : memref<128x128xbf16, #tpu.memory_space<vmem>>, vector<128x128xbf16>
    %c0_3 = arith.constant 0 : index
    %c0_4 = arith.constant 0 : index
    %2 = vector.load %arg3[%c0_3, %c0_4] : memref<1x128xf32, #tpu.memory_space<vmem>>, vector<1x128xf32>
    %cst = arith.constant dense<0.000000e+00> : vector<8x128xf32>
    %3 = tpu.matmul %0, %1, %cst {dimension_numbers = #tpu.dot_dimension_numbers<[1], [0], [0], [1], [0, 0, 1, 1], [], []>} : vector<8x128xbf16>, vector<128x128xbf16>, vector<8x128xf32> -> vector<8x128xf32>
    %4 = vector.broadcast %2 : vector<1x128xf32> to vector<8x128xf32>
    %5 = arith.addf %3, %4 : vector<8x128xf32>
    %cst_5 = arith.constant 0.000000e+00 : f32
    %6 = vector.broadcast %cst_5 : f32 to vector<8x128xf32>
    %7 = arith.maximumf %5, %6 : vector<8x128xf32>
    %8 = arith.truncf %7 : vector<8x128xf32> to vector<8x128xbf16>
    %c0_6 = arith.constant 0 : index
    %c0_7 = arith.constant 0 : index
    %9 = vector.load %arg4[%c0_6, %c0_7] : memref<128x128xbf16, #tpu.memory_space<vmem>>, vector<128x128xbf16>
    %c0_8 = arith.constant 0 : index
    %c0_9 = arith.constant 0 : index
    %10 = vector.load %arg5[%c0_8, %c0_9] : memref<1x128xf32, #tpu.memory_space<vmem>>, vector<1x128xf32>
    %cst_10 = arith.constant dense<0.000000e+00> : vector<8x128xf32>
    %11 = tpu.matmul %8, %9, %cst_10 {dimension_numbers = #tpu.dot_dimension_numbers<[1], [0], [0], [1], [0, 0, 1, 1], [], []>} : vector<8x128xbf16>, vector<128x128xbf16>, vector<8x128xf32> -> vector<8x128xf32>
    %12 = vector.broadcast %10 : vector<1x128xf32> to vector<8x128xf32>
    %13 = arith.addf %11, %12 : vector<8x128xf32>
    %cst_11 = arith.constant 0.000000e+00 : f32
    %14 = vector.broadcast %cst_11 : f32 to vector<8x128xf32>
    %15 = arith.maximumf %13, %14 : vector<8x128xf32>
    %16 = arith.truncf %15 : vector<8x128xf32> to vector<8x128xbf16>
    %c0_12 = arith.constant 0 : index
    %c0_13 = arith.constant 0 : index
    %17 = vector.load %arg6[%c0_12, %c0_13] : memref<128x128xbf16, #tpu.memory_space<vmem>>, vector<128x128xbf16>
    %c0_14 = arith.constant 0 : index
    %c0_15 = arith.constant 0 : index
    %18 = vector.load %arg7[%c0_14, %c0_15] : memref<1x128xf32, #tpu.memory_space<vmem>>, vector<1x128xf32>
    %cst_16 = arith.constant dense<0.000000e+00> : vector<8x128xf32>
    %19 = tpu.matmul %16, %17, %cst_16 {dimension_numbers = #tpu.dot_dimension_numbers<[1], [0], [0], [1], [0, 0, 1, 1], [], []>} : vector<8x128xbf16>, vector<128x128xbf16>, vector<8x128xf32> -> vector<8x128xf32>
    %20 = vector.broadcast %18 : vector<1x128xf32> to vector<8x128xf32>
    %21 = arith.addf %19, %20 : vector<8x128xf32>
    %c0_17 = arith.constant 0 : index
    %c0_18 = arith.constant 0 : index
    %22 = vector.load %arg8[%c0_17, %c0_18] : memref<8x128xf32, #tpu.memory_space<vmem>>, vector<8x128xf32>
    tpu.vector_store %arg8[%c0_17, %c0_18], %21 {strides = array<i32>} : memref<8x128xf32, #tpu.memory_space<vmem>>, vector<8x128xf32>,
    return
  }
  func.func @transform_0(%arg0: i32) -> (i32, i32) {
    %c0_i32 = arith.constant 0 : i32
    %c0_i32_0 = arith.constant 0 : i32
    return %arg0, %c0_i32 : i32, i32
  }
  func.func @transform_1(%arg0: i32) -> (i32, i32) {
    %c0_i32 = arith.constant 0 : i32
    %c0_i32_0 = arith.constant 0 : i32
    %c0_i32_1 = arith.constant 0 : i32
    return %c0_i32, %c0_i32_0 : i32, i32
  }
  func.func @transform_2(%arg0: i32) -> (i32, i32) {
    %c0_i32 = arith.constant 0 : i32
    %c0_i32_0 = arith.constant 0 : i32
    %c0_i32_1 = arith.constant 0 : i32
    return %c0_i32, %c0_i32_0 : i32, i32
  }
  func.func @transform_3(%arg0: i32) -> (i32, i32) {
    %c0_i32 = arith.constant 0 : i32
    %c0_i32_0 = arith.constant 0 : i32
    %c0_i32_1 = arith.constant 0 : i32
    return %c0_i32, %c0_i32_0 : i32, i32
  }
  func.func @transform_4(%arg0: i32) -> (i32, i32) {
    %c0_i32 = arith.constant 0 : i32
    %c0_i32_0 = arith.constant 0 : i32
    %c0_i32_1 = arith.constant 0 : i32
    return %c0_i32, %c0_i32_0 : i32, i32
  }
  func.func @transform_5(%arg0: i32) -> (i32, i32) {
    %c0_i32 = arith.constant 0 : i32
    %c0_i32_0 = arith.constant 0 : i32
    %c0_i32_1 = arith.constant 0 : i32
    return %c0_i32, %c0_i32_0 : i32, i32
  }
  func.func @transform_6(%arg0: i32) -> (i32, i32) {
    %c0_i32 = arith.constant 0 : i32
    %c0_i32_0 = arith.constant 0 : i32
    %c0_i32_1 = arith.constant 0 : i32
    return %c0_i32, %c0_i32_0 : i32, i32
  }
  func.func @transform_7(%arg0: i32) -> (i32, i32) {
    %c0_i32 = arith.constant 0 : i32
    %c0_i32_0 = arith.constant 0 : i32
    return %arg0, %c0_i32 : i32, i32
  }
}

</mosaic_0001>

<llo_original>
// kernel: mlp_forward.1
$region0: #{mlp_forward.1}
  #allocation0 [shape = 'u32[]', space=smem, size = 0x4, offset = 0x4, fixed_abs, tag = 'smem constant byte address 0x4 - core index']
  #allocation1 [shape = 'u32[144,128]{1,0:T(1,128)}', space=vmem, size = 0x12000, scoped, tag = 'internal scratch']
  %s0 = inlined_call_operand.vmem [shape: bf16[8,128], index: 0, kind: input, shape index: {}]
  %s1 = inlined_call_operand.hbm [shape: bf16[128,128], index: 1, kind: input, shape index: {}]
  %s2 = inlined_call_operand.vmem [shape: f32[1,128], index: 2, kind: input, shape index: {}]
  %s3 = inlined_call_operand.hbm [shape: bf16[128,128], index: 3, kind: input, shape index: {}]
  %s4 = inlined_call_operand.vmem [shape: f32[1,128], index: 4, kind: input, shape index: {}]
  %s5 = inlined_call_operand.hbm [shape: bf16[128,128], index: 5, kind: input, shape index: {}]
  %s6 = inlined_call_operand.vmem [shape: f32[1,128], index: 6, kind: input, shape index: {}]
  %s7 = inlined_call_operand.vmem [shape: f32[8,128], index: 7, kind: output, shape index: {}]
  %s8 = sld [smem:[#allocation0]]
  $region50: #{mlp_forward.1} parent=0
    _
  %s10 = ssub.s32 1, %s8
  %s11 = scalar_select 0, %s10, %s8
  $region1: #{mlp_forward.1} parent=0
    #allocation2 [shape = 'u8[32768]{0}', space=vmem, size = 0x8000, scoped, tag = 'input window, operand 1, single buffered']
    #allocation3 [shape = 's32[1]{0}', space=sflag, size = 0x4, scoped, tag = 'scoped memory for mlp_forward.1']
    #allocation4 [shape = 'u8[32768]{0}', space=vmem, size = 0x8000, scoped, tag = 'input window, operand 3, single buffered']
    #allocation5 [shape = 's32[1]{0}', space=sflag, size = 0x4, scoped, tag = 'scoped memory for mlp_forward.1']
    #allocation6 [shape = 'u8[32768]{0}', space=vmem, size = 0x8000, scoped, tag = 'input window, operand 5, single buffered']
    %12 = vsyncpa [#allocation3], 0
    %13 = vsyncpa [#allocation5], 0
    // Predicated region
    $region2: #{mlp_forward.1} parent=1 // pred_check
      _
    $region3: #{mlp_forward.1} parent=1 // pred_check_branch
      %15 = sbr.rel (0) target = $region5
    $region4: #{mlp_forward.1} parent=1 // pred_region
      _
    $region5: #{mlp_forward.1} parent=1 // pred_fallthru
      _
    // Predicated region
    $region6: #{mlp_forward.1} parent=1 // pred_check
      _
    $region7: #{mlp_forward.1} parent=1 // pred_check_branch
      %17 = sbr.rel (0) target = $region9
    $region8: #{mlp_forward.1} parent=1 // pred_region
      %s19 = ssub.s32 1024, 1024
      %20 = vsyncadd [#allocation3], %s19
      %s21 = sshll.u32 [#allocation2], 4
      %s22 = int_to_ptr.vmem [resolvable:$true] %s21
      %27 = dma.hbm_to_vmem [thread:$0]  %s1, 1024, %s22, [#allocation3], 64, 64, 4
    $region9: #{mlp_forward.1} parent=1 // pred_fallthru
      _
    // Predicated region
    $region10: #{mlp_forward.1} parent=1 // pred_check
      _
    $region11: #{mlp_forward.1} parent=1 // pred_check_branch
      %29 = sbr.rel (0) target = $region13
    $region12: #{mlp_forward.1} parent=1 // pred_region
      _
    $region13: #{mlp_forward.1} parent=1 // pred_fallthru
      _
    // Predicated region
    $region14: #{mlp_forward.1} parent=1 // pred_check
      _
    $region15: #{mlp_forward.1} parent=1 // pred_check_branch
      %31 = sbr.rel (0) target = $region17
    $region16: #{mlp_forward.1} parent=1 // pred_region
      %s33 = ssub.s32 1024, 1024
      %34 = vsyncadd [#allocation5], %s33
      %s35 = sshll.u32 [#allocation4], 4
      %s36 = int_to_ptr.vmem [resolvable:$true] %s35
      %41 = dma.hbm_to_vmem [thread:$0]  %s3, 1024, %s36, [#allocation5], 64, 64, 4
    $region17: #{mlp_forward.1} parent=1 // pred_fallthru
      _
    // Predicated region
    $region18: #{mlp_forward.1} parent=1 // pred_check
      _
    $region19: #{mlp_forward.1} parent=1 // pred_check_branch
      %43 = sbr.rel (0) target = $region21
    $region20: #{mlp_forward.1} parent=1 // pred_region
      _
    $region21: #{mlp_forward.1} parent=1 // pred_fallthru
      _
    // Predicated region
    $region22: #{mlp_forward.1} parent=1 // pred_check
      _
    $region23: #{mlp_forward.1} parent=1 // pred_check_branch
      %45 = sbr.rel (0) target = $region25
    $region24: #{mlp_forward.1} parent=1 // pred_region
      %s47 = ssub.s32 1024, 1024
      %48 = vsyncadd [#allocation5], %s47
      %s49 = sshll.u32 [#allocation6], 4
      %s50 = int_to_ptr.vmem [resolvable:$true] %s49
      %55 = dma.hbm_to_vmem [thread:$0]  %s5, 1024, %s50, [#allocation5], 64, 64, 4
    $region25: #{mlp_forward.1} parent=1 // pred_fallthru
      _
    // Predicated region
    $region26: #{mlp_forward.1} parent=1 // pred_check
      _
    $region27: #{mlp_forward.1} parent=1 // pred_check_branch
      %57 = sbr.rel (0) target = $region29
    $region28: #{mlp_forward.1} parent=1 // pred_region
      _
    $region29: #{mlp_forward.1} parent=1 // pred_fallthru
      _
    // Predicated region
    $region30: #{mlp_forward.1} parent=1 // pred_check
      _
    $region31: #{mlp_forward.1} parent=1 // pred_check_branch
      %59 = sbr.rel (0) target = $region33
    $region32: #{mlp_forward.1} parent=1 // pred_region
      %60 = dma.done [#allocation3], 1024
    $region33: #{mlp_forward.1} parent=1 // pred_fallthru
      _
    // Predicated region
    $region34: #{mlp_forward.1} parent=1 // pred_check
      _
    $region35: #{mlp_forward.1} parent=1 // pred_check_branch
      %62 = sbr.rel (0) target = $region37
    $region36: #{mlp_forward.1} parent=1 // pred_region
      %63 = dma.done [#allocation5], 1024
    $region37: #{mlp_forward.1} parent=1 // pred_fallthru
      _
    // Predicated region
    $region38: #{mlp_forward.1} parent=1 // pred_check
      _
    $region39: #{mlp_forward.1} parent=1 // pred_check_branch
      %65 = sbr.rel (0) target = $region41
    $region40: #{mlp_forward.1} parent=1 // pred_region
      %66 = dma.done [#allocation5], 1024
    $region41: #{mlp_forward.1} parent=1 // pred_fallthru
      _
    %v68 = vld [vmem:[%s0] sm:$0xf]
    %v69 = vld [vmem:[#allocation2] sm:$0xf]
    %v70 = vld [vmem:[#allocation2 + $0x4] sm:$0xf]
    %v71 = vld [vmem:[#allocation2 + $0x8] sm:$0xf]
    %v72 = vld [vmem:[#allocation2 + $0xc] sm:$0xf]
    %v73 = vld [vmem:[#allocation2 + $0x10] sm:$0xf]
    %v74 = vld [vmem:[#allocation2 + $0x14] sm:$0xf]
    %v75 = vld [vmem:[#allocation2 + $0x18] sm:$0xf]
    %v76 = vld [vmem:[#allocation2 + $0x1c] sm:$0xf]
    %v77 = vld [vmem:[#allocation2 + $0x20] sm:$0xf]
    %v78 = vld [vmem:[#allocation2 + $0x24] sm:$0xf]
    %v79 = vld [vmem:[#allocation2 + $0x28] sm:$0xf]
    %v80 = vld [vmem:[#allocation2 + $0x2c] sm:$0xf]
    %v81 = vld [vmem:[#allocation2 + $0x30] sm:$0xf]
    %v82 = vld [vmem:[#allocation2 + $0x34] sm:$0xf]
    %v83 = vld [vmem:[#allocation2 + $0x38] sm:$0xf]
    %v84 = vld [vmem:[#allocation2 + $0x3c] sm:$0xf]
    %v85 = vld [vmem:[%s2] sm:$0x1]
    %v87 = vlaneseq
    %v88 = vshrl.u32 %v87, 7
    %v89 = vsub.s32 0, %v88
    %v90 = vrot.slane %v85, %v89
    %v108 = vunpack.c.l.b16 %v69
    %v109 = vunpack.c.l.b16 %v70
    %v110 = vunpack.c.l.b16 %v71
    %v111 = vunpack.c.l.b16 %v72
    %v112 = vunpack.c.l.b16 %v73
    %v113 = vunpack.c.l.b16 %v74
    %v114 = vunpack.c.l.b16 %v75
    %v115 = vunpack.c.l.b16 %v76
    %v116 = vunpack.c.l.b16 %v77
    %v117 = vunpack.c.l.b16 %v78
    %v118 = vunpack.c.l.b16 %v79
    %v119 = vunpack.c.l.b16 %v80
    %v120 = vunpack.c.l.b16 %v81
    %v121 = vunpack.c.l.b16 %v82
    %v122 = vunpack.c.l.b16 %v83
    %v123 = vunpack.c.l.b16 %v84
    %v124 = vpack.c.b16 %v109, %v108
    %v125 = vpack.c.b16 %v111, %v110
    %v126 = vpack.c.b16 %v113, %v112
    %v127 = vpack.c.b16 %v115, %v114
    %v128 = vpack.c.b16 %v117, %v116
    %v129 = vpack.c.b16 %v119, %v118
    %v130 = vpack.c.b16 %v121, %v120
    %v131 = vpack.c.b16 %v123, %v122
    %140 = vmatprep.subr.bf16.mxu0 0
    %141 = vmatpush1.bf16.msra.mxu0 %v131
    %142 = vmatprep.subr.bf16.mxu0 0
    %143 = vmatpush1.bf16.msra.mxu0 %v130
    %144 = vmatprep.subr.bf16.mxu0 0
    %145 = vmatpush1.bf16.msra.mxu0 %v129
    %146 = vmatprep.subr.bf16.mxu0 0
    %147 = vmatpush1.bf16.msra.mxu0 %v128
    %148 = vmatprep.subr.bf16.mxu0 0
    %149 = vmatpush1.bf16.msra.mxu0 %v127
    %150 = vmatprep.subr.bf16.mxu0 0
    %151 = vmatpush1.bf16.msra.mxu0 %v126
    %152 = vmatprep.subr.bf16.mxu0 0
    %153 = vmatpush1.bf16.msra.mxu0 %v125
    %154 = vmatprep.subr.bf16.mxu0 0
    %155 = vmatpush1.bf16.msra.mxu0 %v124
    %156 = vmatprep.subr.bf16.mxu0 0
    %157 = vmatpush2.bf16.msra.mxu0 0
    %158 = vmatprep.subr.bf16.mxu0 0
    %159 = vmatpush2.bf16.msra.mxu0 0
    %160 = vmatprep.subr.bf16.mxu0 0
    %161 = vmatpush2.bf16.msra.mxu0 0
    %162 = vmatprep.subr.bf16.mxu0 0
    %163 = vmatpush2.bf16.msra.mxu0 0
    %164 = vmatprep.subr.bf16.mxu0 0
    %165 = vmatpush2.bf16.msra.mxu0 0
    %166 = vmatprep.subr.bf16.mxu0 0
    %167 = vmatpush2.bf16.msra.mxu0 0
    %168 = vmatprep.subr.bf16.mxu0 0
    %169 = vmatpush2.bf16.msra.mxu0 0
    %170 = vmatprep.subr.bf16.mxu0 0
    %171 = vmatpush2.bf16.msra.mxu0 0
    %172 = vmatprep.mubr.bf16.mxu0 0
    %173 = vmatmul.mubr.bf16.gmra.mxu0 %v68
    %v174 = vpop.f32.mrf.mxu0
    %v175 = vadd.f32 %v90, %v174
    %v176 = vpop.f32.mrf.mxu0
    %v177 = vpop.f32.mrf.mxu0
    %v178 = vpop.f32.mrf.mxu0
    %179 = vdwg.mxu0
    %v180 = vmax.f32 %v175, 0.0
    %v181 = vpack.c.bf16 %v180, %v180
    %v182 = vld [vmem:[#allocation4] sm:$0xf]
    %v183 = vld [vmem:[#allocation4 + $0x4] sm:$0xf]
    %v184 = vld [vmem:[#allocation4 + $0x8] sm:$0xf]
    %v185 = vld [vmem:[#allocation4 + $0xc] sm:$0xf]
    %v186 = vld [vmem:[#allocation4 + $0x10] sm:$0xf]
    %v187 = vld [vmem:[#allocation4 + $0x14] sm:$0xf]
    %v188 = vld [vmem:[#allocation4 + $0x18] sm:$0xf]
    %v189 = vld [vmem:[#allocation4 + $0x1c] sm:$0xf]
    %v190 = vld [vmem:[#allocation4 + $0x20] sm:$0xf]
    %v191 = vld [vmem:[#allocation4 + $0x24] sm:$0xf]
    %v192 = vld [vmem:[#allocation4 + $0x28] sm:$0xf]
    %v193 = vld [vmem:[#allocation4 + $0x2c] sm:$0xf]
    %v194 = vld [vmem:[#allocation4 + $0x30] sm:$0xf]
    %v195 = vld [vmem:[#allocation4 + $0x34] sm:$0xf]
    %v196 = vld [vmem:[#allocation4 + $0x38] sm:$0xf]
    %v197 = vld [vmem:[#allocation4 + $0x3c] sm:$0xf]
    %v198 = vld [vmem:[%s4] sm:$0x1]
    %v200 = vlaneseq
    %v201 = vshrl.u32 %v200, 7
    %v202 = vsub.s32 0, %v201
    %v203 = vrot.slane %v198, %v202
    %v221 = vunpack.c.l.b16 %v182
    %v222 = vunpack.c.l.b16 %v183
    %v223 = vunpack.c.l.b16 %v184
    %v224 = vunpack.c.l.b16 %v185
    %v225 = vunpack.c.l.b16 %v186
    %v226 = vunpack.c.l.b16 %v187
    %v227 = vunpack.c.l.b16 %v188
    %v228 = vunpack.c.l.b16 %v189
    %v229 = vunpack.c.l.b16 %v190
    %v230 = vunpack.c.l.b16 %v191
    %v231 = vunpack.c.l.b16 %v192
    %v232 = vunpack.c.l.b16 %v193
    %v233 = vunpack.c.l.b16 %v194
    %v234 = vunpack.c.l.b16 %v195
    %v235 = vunpack.c.l.b16 %v196
    %v236 = vunpack.c.l.b16 %v197
    %v237 = vpack.c.b16 %v222, %v221
    %v238 = vpack.c.b16 %v224, %v223
    %v239 = vpack.c.b16 %v226, %v225
    %v240 = vpack.c.b16 %v228, %v227
    %v241 = vpack.c.b16 %v230, %v229
    %v242 = vpack.c.b16 %v232, %v231
    %v243 = vpack.c.b16 %v234, %v233
    %v244 = vpack.c.b16 %v236, %v235
    %253 = vmatprep.subr.bf16.mxu0 0
    %254 = vmatpush1.bf16.msra.mxu0 %v244
    %255 = vmatprep.subr.bf16.mxu0 0
    %256 = vmatpush1.bf16.msra.mxu0 %v243
    %257 = vmatprep.subr.bf16.mxu0 0
    %258 = vmatpush1.bf16.msra.mxu0 %v242
    %259 = vmatprep.subr.bf16.mxu0 0
    %260 = vmatpush1.bf16.msra.mxu0 %v241
    %261 = vmatprep.subr.bf16.mxu0 0
    %262 = vmatpush1.bf16.msra.mxu0 %v240
    %263 = vmatprep.subr.bf16.mxu0 0
    %264 = vmatpush1.bf16.msra.mxu0 %v239
    %265 = vmatprep.subr.bf16.mxu0 0
    %266 = vmatpush1.bf16.msra.mxu0 %v238
    %267 = vmatprep.subr.bf16.mxu0 0
    %268 = vmatpush1.bf16.msra.mxu0 %v237
    %269 = vmatprep.subr.bf16.mxu0 0
    %270 = vmatpush2.bf16.msra.mxu0 0
    %271 = vmatprep.subr.bf16.mxu0 0
    %272 = vmatpush2.bf16.msra.mxu0 0
    %273 = vmatprep.subr.bf16.mxu0 0
    %274 = vmatpush2.bf16.msra.mxu0 0
    %275 = vmatprep.subr.bf16.mxu0 0
    %276 = vmatpush2.bf16.msra.mxu0 0
    %277 = vmatprep.subr.bf16.mxu0 0
    %278 = vmatpush2.bf16.msra.mxu0 0
    %279 = vmatprep.subr.bf16.mxu0 0
    %280 = vmatpush2.bf16.msra.mxu0 0
    %281 = vmatprep.subr.bf16.mxu0 0
    %282 = vmatpush2.bf16.msra.mxu0 0
    %283 = vmatprep.subr.bf16.mxu0 0
    %284 = vmatpush2.bf16.msra.mxu0 0
    %285 = vmatprep.mubr.bf16.mxu0 0
    %286 = vmatmul.mubr.bf16.gmra.mxu0 %v181
    %v287 = vpop.f32.mrf.mxu0
    %v288 = vadd.f32 %v203, %v287
    %v289 = vpop.f32.mrf.mxu0
    %v290 = vpop.f32.mrf.mxu0
    %v291 = vpop.f32.mrf.mxu0
    %292 = vdwg.mxu0
    %v293 = vmax.f32 %v288, 0.0
    %v294 = vpack.c.bf16 %v293, %v293
    %v295 = vld [vmem:[#allocation6] sm:$0xf]
    %v296 = vld [vmem:[#allocation6 + $0x4] sm:$0xf]
    %v297 = vld [vmem:[#allocation6 + $0x8] sm:$0xf]
    %v298 = vld [vmem:[#allocation6 + $0xc] sm:$0xf]
    %v299 = vld [vmem:[#allocation6 + $0x10] sm:$0xf]
    %v300 = vld [vmem:[#allocation6 + $0x14] sm:$0xf]
    %v301 = vld [vmem:[#allocation6 + $0x18] sm:$0xf]
    %v302 = vld [vmem:[#allocation6 + $0x1c] sm:$0xf]
    %v303 = vld [vmem:[#allocation6 + $0x20] sm:$0xf]
    %v304 = vld [vmem:[#allocation6 + $0x24] sm:$0xf]
    %v305 = vld [vmem:[#allocation6 + $0x28] sm:$0xf]
    %v306 = vld [vmem:[#allocation6 + $0x2c] sm:$0xf]
    %v307 = vld [vmem:[#allocation6 + $0x30] sm:$0xf]
    %v308 = vld [vmem:[#allocation6 + $0x34] sm:$0xf]
    %v309 = vld [vmem:[#allocation6 + $0x38] sm:$0xf]
    %v310 = vld [vmem:[#allocation6 + $0x3c] sm:$0xf]
    %v311 = vld [vmem:[%s6] sm:$0x1]
    %v313 = vlaneseq
    %v314 = vshrl.u32 %v313, 7
    %v315 = vsub.s32 0, %v314
    %v316 = vrot.slane %v311, %v315
    %v334 = vunpack.c.l.b16 %v295
    %v335 = vunpack.c.l.b16 %v296
    %v336 = vunpack.c.l.b16 %v297
    %v337 = vunpack.c.l.b16 %v298
    %v338 = vunpack.c.l.b16 %v299
    %v339 = vunpack.c.l.b16 %v300
    %v340 = vunpack.c.l.b16 %v301
    %v341 = vunpack.c.l.b16 %v302
    %v342 = vunpack.c.l.b16 %v303
    %v343 = vunpack.c.l.b16 %v304
    %v344 = vunpack.c.l.b16 %v305
    %v345 = vunpack.c.l.b16 %v306
    %v346 = vunpack.c.l.b16 %v307
    %v347 = vunpack.c.l.b16 %v308
    %v348 = vunpack.c.l.b16 %v309
    %v349 = vunpack.c.l.b16 %v310
    %v350 = vpack.c.b16 %v335, %v334
    %v351 = vpack.c.b16 %v337, %v336
    %v352 = vpack.c.b16 %v339, %v338
    %v353 = vpack.c.b16 %v341, %v340
    %v354 = vpack.c.b16 %v343, %v342
    %v355 = vpack.c.b16 %v345, %v344
    %v356 = vpack.c.b16 %v347, %v346
    %v357 = vpack.c.b16 %v349, %v348
    %366 = vmatprep.subr.bf16.mxu0 0
    %367 = vmatpush1.bf16.msra.mxu0 %v357
    %368 = vmatprep.subr.bf16.mxu0 0
    %369 = vmatpush1.bf16.msra.mxu0 %v356
    %370 = vmatprep.subr.bf16.mxu0 0
    %371 = vmatpush1.bf16.msra.mxu0 %v355
    %372 = vmatprep.subr.bf16.mxu0 0
    %373 = vmatpush1.bf16.msra.mxu0 %v354
    %374 = vmatprep.subr.bf16.mxu0 0
    %375 = vmatpush1.bf16.msra.mxu0 %v353
    %376 = vmatprep.subr.bf16.mxu0 0
    %377 = vmatpush1.bf16.msra.mxu0 %v352
    %378 = vmatprep.subr.bf16.mxu0 0
    %379 = vmatpush1.bf16.msra.mxu0 %v351
    %380 = vmatprep.subr.bf16.mxu0 0
    %381 = vmatpush1.bf16.msra.mxu0 %v350
    %382 = vmatprep.subr.bf16.mxu0 0
    %383 = vmatpush2.bf16.msra.mxu0 0
    %384 = vmatprep.subr.bf16.mxu0 0
    %385 = vmatpush2.bf16.msra.mxu0 0
    %386 = vmatprep.subr.bf16.mxu0 0
    %387 = vmatpush2.bf16.msra.mxu0 0
    %388 = vmatprep.subr.bf16.mxu0 0
    %389 = vmatpush2.bf16.msra.mxu0 0
    %390 = vmatprep.subr.bf16.mxu0 0
    %391 = vmatpush2.bf16.msra.mxu0 0
    %392 = vmatprep.subr.bf16.mxu0 0
    %393 = vmatpush2.bf16.msra.mxu0 0
    %394 = vmatprep.subr.bf16.mxu0 0
    %395 = vmatpush2.bf16.msra.mxu0 0
    %396 = vmatprep.subr.bf16.mxu0 0
    %397 = vmatpush2.bf16.msra.mxu0 0
    %398 = vmatprep.mubr.bf16.mxu0 0
    %399 = vmatmul.mubr.bf16.gmra.mxu0 %v294
    %v400 = vpop.f32.mrf.mxu0
    %v401 = vadd.f32 %v316, %v400
    %v402 = vpop.f32.mrf.mxu0
    %v403 = vpop.f32.mrf.mxu0
    %v404 = vpop.f32.mrf.mxu0
    %405 = vdwg.mxu0
    %406 = vst [vmem:[%s7] sm:$0xff] %v401
    // Predicated region
    $region42: #{mlp_forward.1} parent=1 // pred_check
      _
    $region43: #{mlp_forward.1} parent=1 // pred_check_branch
      %408 = sbr.rel (0) target = $region45
    $region44: #{mlp_forward.1} parent=1 // pred_region
      _
    $region45: #{mlp_forward.1} parent=1 // pred_fallthru
      _
    // Predicated region
    $region46: #{mlp_forward.1} parent=1 // pred_check
      _
    $region47: #{mlp_forward.1} parent=1 // pred_check_branch
      %410 = sbr.rel (0) target = $region49
    $region48: #{mlp_forward.1} parent=1 // pred_region
      _
    $region49: #{mlp_forward.1} parent=1 // pred_fallthru
      _
    %411 = vsyncpa [#allocation3], 1
    %412 = vsyncpa [#allocation5], 1

</llo_original>
